<compile_context>
chip_gen: v6e
topology: v6e:2x2x1
jax: 0.10.0
libtpu: 0.0.40
codegen_flags: <defaults>
</compile_context>

<pallas_src>
import jax
import jax.numpy as jnp
from jax import lax
from jax.experimental import pallas as pl
from jax.experimental.pallas import tpu as pltpu


def _round_up(x, m):
    return -(-x // m) * m


def _vmem_budget():
    """Generation-aware scoped-VMEM budget (bytes)."""
    try:
        cap = pltpu.get_tpu_info().vmem_capacity_bytes
    except Exception:
        cap = 64 << 20  # conservative fallback: assume v7x (smallest VMEM)
    # 128 MiB parts (v5e/v6e): 64 MiB scoped; 64 MiB parts (v7x): 32 MiB.
    return (64 << 20) if cap >= (128 << 20) else (32 << 20)


def _pick_batch_tile(B, L, Cin, K, F_pad, P, in_bytes, budget_bytes):
    """Largest divisor-of-B batch tile whose lane-padded VMEM footprint fits."""
    Ls = _round_up(L, 8)
    cin_lane = _round_up(Cin, 128)            # x tile last dim pads to 128 lanes
    kcin_lane = _round_up(K * Cin, 128)       # im2col contraction dim lane pad
    lout_s = _round_up(max(L // P, 1), 8)
    per_b = (
        2 * Ls * cin_lane * in_bytes          # x tile (double buffered)
        + 3 * Ls * kcin_lane * 4              # im2col (f32 build) + shifted views
        + Ls * F_pad * 4                      # f32 conv accumulator
        + 3 * Ls * F_pad * 4                  # BN FMA / ReLU / pool temporaries
        + 2 * lout_s * F_pad * 4              # output tile (double buffered)
    )
    const = 2 * _round_up(K * Cin, 8) * F_pad * in_bytes + 64 * F_pad * 4
    tb = max(1, min(B, (budget_bytes - const) // max(per_b, 1)))
    # Keep >= min(B, 4) grid steps: feeds both v7x TensorCores and gives the
    # BlockSpec pipeline a next-tile DMA to hide behind compute.
    tb = min(tb, max(1, B // min(B, 4)))
    while B % tb:
        tb -= 1
    return tb


def spatial_block(x, w, b, gamma, beta, pooling_factor, *,
                  eps=1e-5, dot_dtype=jnp.bfloat16):
    """Forward pass of Spatial_Block.

    x:     (B, L, C_in)  (module's (batch, seq, channels) layout)
    w:     (K, C_in, F) conv weight   (transpose of PyTorch's (F, C_in, K))
    b:     (F,) conv bias -- accepted for API parity but unused: a Conv1d bias
           followed by training-mode BatchNorm is cancelled exactly by the
           mean subtraction.
    gamma, beta: (F,) BatchNorm affine parameters.
    pooling_factor: MaxPool1d kernel == stride.
    dot_dtype: MXU input dtype (bf16 = native fast path on v5e/v6e/v7x;
           accumulation / BN statistics stay f32).
    Returns (B, L // pooling_factor, F) float32.
    """
    del b  # cancelled by training-mode BN
    # TODO(synk): reinstate the conv bias if eval-mode (running-stats) BN is needed.

    B, L, Cin = x.shape
    K, _, F = w.shape
    P = int(pooling_factor)
    Lout = L // P
    assert Lout >= 1 and K <= L

    pad_l = (K - 1) // 2  # PyTorch 'same' padding split for stride=1

    # Lane-dense channel padding: all per-channel arrays live on a 128-lane
    # multiple so output stores are unmasked and epilogue VPU ops run full width.
    F_pad = _round_up(F, 128)

    x_k = x if x.dtype == dot_dtype else x.astype(dot_dtype)   # no HBM pad/upcast
    w_pad = jnp.pad(w, ((0, 0), (0, 0), (0, F_pad - F))) if F_pad != F else w
    w_flat = w_pad.astype(dot_dtype).reshape(K * Cin, F_pad)   # (K*Cin, F_pad)
    gamma_pad = jnp.pad(gamma.astype(jnp.float32), (0, F_pad - F))
    beta_pad = jnp.pad(beta.astype(jnp.float32), (0, F_pad - F))

    in_bytes = jnp.dtype(dot_dtype).itemsize
    budget = _vmem_budget()
    TB = _pick_batch_tile(B, L, Cin, K, F_pad, P, in_bytes, budget // 2)
    ntiles = B // TB

    cparams = pltpu.CompilerParams(
        dimension_semantics=("parallel",),     # shard batch tiles across TCs
        vmem_limit_bytes=budget,
    )
    # TODO(synk): add a second (parallel) grid axis over L with overlapping
    # halo blocks when ntiles < 2 * num_cores (keeps both v7x TCs busy for B=1).

    x_spec = pl.BlockSpec((TB, L, Cin), lambda i: (i, 0, 0))
    w_spec = pl.BlockSpec((K * Cin, F_pad), lambda i: (0, 0))

    def _conv(x_ref, w_ref):
        """Conv1d('same', stride 1) as ONE MXU dot over a K*Cin contraction.

        The K-1 halo is handled here: each tap's shifted view is zero-filled at
        the sequence boundaries.  The im2col operand is assembled in f32 (robust
        sublane/lane concatenation) and cast to dot_dtype only for the dot.
        """
        xv = x_ref[...].astype(jnp.float32)                      # (TB, L, Cin)
        views = []
        for k in range(K):
            d = k - pad_l
            if d < 0:
                z = jnp.zeros((TB, -d, Cin), dtype=xv.dtype)
                views.append(jnp.concatenate([z, xv[:, :L + d, :]], axis=1))
            elif d > 0:
                z = jnp.zeros((TB, d, Cin), dtype=xv.dtype)
                views.append(jnp.concatenate([xv[:, d:, :], z], axis=1))
            else:
                views.append(xv)
        im2col = jnp.concatenate(views, axis=-1).reshape(TB * L, K * Cin)
        return jnp.dot(im2col.astype(dot_dtype), w_ref[...],
                       preferred_element_type=jnp.float32)       # (TB*L, F_pad)

    # ---- pass 1: conv + per-tile BatchNorm partial statistics ---------------
    def stats_kernel(x_ref, w_ref, sum_ref, sumsq_ref):
        acc = _conv(x_ref, w_ref)                                # (TB*L, F_pad)
        sum_ref[...] = jnp.sum(acc, axis=0).reshape(1, 1, F_pad)
        sumsq_ref[...] = jnp.sum(acc * acc, axis=0).reshape(1, 1, F_pad)

    part_sum, part_sumsq = pl.pallas_call(
        stats_kernel,
        grid=(ntiles,),
        in_specs=[x_spec, w_spec],
        out_specs=[pl.BlockSpec((1, 1, F_pad), lambda i: (i, 0, 0)),
                   pl.BlockSpec((1, 1, F_pad), lambda i: (i, 0, 0))],
        out_shape=[jax.ShapeDtypeStruct((ntiles, 1, F_pad), jnp.float32),
                   jax.ShapeDtypeStruct((ntiles, 1, F_pad), jnp.float32)],
        compiler_params=cparams,
    )(x_k, w_flat)

    # ---- tiny per-channel (F_pad,) math in plain JAX -------------------------
    n = jnp.float32(B * L)
    mean = jnp.sum(part_sum, axis=(0, 1)) / n
    # E[x^2]-E[x]^2 in f32; per-tile partials limit cancellation.
    # TODO(synk): centered second pass if B*L grows enough for f32 cancellation.
    var = jnp.maximum(jnp.sum(part_sumsq, axis=(0, 1)) / n - mean * mean, 0.0)
    scale = gamma_pad * lax.rsqrt(var + eps)       # padded channels: gamma=0 -> 0
    shift = beta_pad - mean * scale

    # ---- pass 2: conv + fused BN FMA + ReLU + max-pool -----------------------
    # (Recompute of the conv is cheaper than caching it to HBM while Cin << F;
    #  TODO(synk): cache pass-1 conv output in bf16 when F*2 < Cin*in_bytes.)
    def apply_kernel(x_ref, w_ref, scale_ref, shift_ref, o_ref):
        acc = _conv(x_ref, w_ref)                                # (TB*L, F_pad)
        y = jnp.maximum(acc * scale_ref[...] + shift_ref[...], 0.0)
        y = y.reshape(TB, L, F_pad)[:, :Lout * P, :].reshape(TB, Lout, P, F_pad)
        o_ref[...] = jnp.max(y, axis=2)            # MaxPool1d(P, stride=P)

    out = pl.pallas_call(
        apply_kernel,
        grid=(ntiles,),
        in_specs=[x_spec, w_spec,
                  pl.BlockSpec((1, F_pad), lambda i: (0, 0)),
                  pl.BlockSpec((1, F_pad), lambda i: (0, 0))],
        out_specs=pl.BlockSpec((TB, Lout, F_pad), lambda i: (i, 0, 0)),
        out_shape=jax.ShapeDtypeStruct((B, Lout, F_pad), jnp.float32),
        compiler_params=cparams,
    )(x_k, w_flat, scale.reshape(1, F_pad), shift.reshape(1, F_pad))

    return out[:, :, :F] if F_pad != F else out


def spatial_block_reference(x, w, b, gamma, beta, pooling_factor):
    """Pure-JAX reference mirroring the PyTorch forward (training-mode BN)."""
    B, L, Cin = x.shape
    K, _, F = w.shape
    xt = jnp.transpose(x, (0, 2, 1))                       # (B, Cin, L)
    w_oiw = jnp.transpose(w, (2, 1, 0))                    # (F, Cin, K)
    y = lax.conv_general_dilated(
        xt, w_oiw, window_strides=(1,), padding="SAME",
        dimension_numbers=("NCH", "OIH", "NCH"))           # (B, F, L)
    y = y + b[None, :, None]
    mean = jnp.mean(y, axis=(0, 2), keepdims=True)
    var = jnp.mean((y - mean) ** 2, axis=(0, 2), keepdims=True)
    y = (y - mean) * lax.rsqrt(var + 1e-5)
    y = y * gamma[None, :, None] + beta[None, :, None]
    y = jnp.maximum(y, 0.0)
    Lout = L // pooling_factor
    y = y[:, :, :Lout * pooling_factor].reshape(B, F, Lout, pooling_factor).max(axis=-1)
    return jnp.transpose(y, (0, 2, 1))                     # (B, Lout, F)


if __name__ == "__main__":
    # Small shapes consistent with the module.
    B, L, C_in = 2, 16, 4
    kernel_size, num_filters, pooling_factor = 3, 8, 2

    key = jax.random.PRNGKey(0)
    kx, kw, kb, kg, kbeta = jax.random.split(key, 5)

    x = jax.random.normal(kx, (B, L, C_in), dtype=jnp.float32)
    # Conv1d weight in kernel layout (K, C_in, F); bias (F,).
    w = 0.3 * jax.random.normal(kw, (kernel_size, C_in, num_filters), dtype=jnp.float32)
    b = 0.1 * jax.random.normal(kb, (num_filters,), dtype=jnp.float32)
    # BatchNorm affine params.
    gamma = 1.0 + 0.1 * jax.random.normal(kg, (num_filters,), dtype=jnp.float32)
    beta = 0.1 * jax.random.normal(kbeta, (num_filters,), dtype=jnp.float32)

    ref = spatial_block_reference(x, w, b, gamma, beta, pooling_factor)

    # f32 MXU path: tight check against the reference.
    out_f32 = jax.block_until_ready(
        spatial_block(x, w, b, gamma, beta, pooling_factor, dot_dtype=jnp.float32))
    assert out_f32.shape == (B, L // pooling_factor, num_filters), out_f32.shape
    assert jnp.allclose(out_f32, ref, atol=2e-4, rtol=2e-4), \
        float(jnp.max(jnp.abs(out_f32 - ref)))

    # Default bf16 MXU path (fast path on v5e/v6e/v7x): looser tolerance.
    out_bf16 = jax.block_until_ready(
        spatial_block(x, w, b, gamma, beta, pooling_factor))
    assert out_bf16.shape == (B, L // pooling_factor, num_filters), out_bf16.shape
    assert jnp.allclose(out_bf16, ref, atol=6e-2, rtol=6e-2), \
        float(jnp.max(jnp.abs(out_bf16 - ref)))

    print("KERNEL_OK")
</pallas_src>

<mosaic_0001>
module attributes {stable_mosaic.version = 11 : i64} {
  func.func @stats_kernel(%arg0: i32, %arg1: memref<1x16x4xf32, #tpu.memory_space<vmem>>, %arg2: memref<12x128xf32, #tpu.memory_space<vmem>>, %arg3: memref<1x1x128xf32, #tpu.memory_space<vmem>>, %arg4: memref<1x1x128xf32, #tpu.memory_space<vmem>>) attributes {dimension_semantics = [#tpu.dimension_semantics<parallel>], iteration_bounds = array<i64: 2>, scalar_prefetch = 0 : i64, scratch_operands = 0 : i64, tpu.core_type = #tpu.core_type<tc>, window_params = [{transform_indices = @transform_0, window_bounds = array<i64: 1, 16, 4>}, {pipeline_mode = #tpu.pipeline_mode<synchronous>, transform_indices = @transform_1, window_bounds = array<i64: 12, 128>}, {transform_indices = @transform_2, window_bounds = array<i64: 1, 1, 128>}, {transform_indices = @transform_3, window_bounds = array<i64: 1, 1, 128>}]} {
    %c0 = arith.constant 0 : index
    %c0_0 = arith.constant 0 : index
    %c0_1 = arith.constant 0 : index
    %0 = vector.load %arg1[%c0, %c0_0, %c0_1] : memref<1x16x4xf32, #tpu.memory_space<vmem>>, vector<1x16x4xf32>
    %cst = arith.constant 0.000000e+00 : f32
    %1 = vector.broadcast %cst : f32 to vector<1x1x4xf32>
    %2 = vector.extract_strided_slice %0 {offsets = [0, 0, 0], sizes = [1, 15, 4], strides = [1, 1, 1]} : vector<1x16x4xf32> to vector<1x15x4xf32>
    %3 = tpu.concatenate %1, %2 in 1 : vector<1x1x4xf32>, vector<1x15x4xf32> -> vector<1x16x4xf32>
    %cst_2 = arith.constant 0.000000e+00 : f32
    %4 = vector.broadcast %cst_2 : f32 to vector<1x1x4xf32>
    %5 = vector.extract_strided_slice %0 {offsets = [0, 1, 0], sizes = [1, 15, 4], strides = [1, 1, 1]} : vector<1x16x4xf32> to vector<1x15x4xf32>
    %6 = tpu.concatenate %5, %4 in 1 : vector<1x15x4xf32>, vector<1x1x4xf32> -> vector<1x16x4xf32>
    %7 = tpu.concatenate %3, %0, %6 in 2 : vector<1x16x4xf32>, vector<1x16x4xf32>, vector<1x16x4xf32> -> vector<1x16x12xf32>
    %8 = vector.shape_cast %7 : vector<1x16x12xf32> to vector<16x12xf32>
    %c0_3 = arith.constant 0 : index
    %c0_4 = arith.constant 0 : index
    %9 = vector.load %arg2[%c0_3, %c0_4] : memref<12x128xf32, #tpu.memory_space<vmem>>, vector<12x128xf32>
    %cst_5 = arith.constant dense<0.000000e+00> : vector<16x128xf32>
    %10 = tpu.matmul %8, %9, %cst_5 {dimension_numbers = #tpu.dot_dimension_numbers<[1], [0], [0], [1], [0, 0, 1, 1], [], []>} : vector<16x12xf32>, vector<12x128xf32>, vector<16x128xf32> -> vector<16x128xf32>
    %cst_6 = arith.constant dense<0.000000e+00> : vector<128xf32>
    %11 = vector.multi_reduction <add>, %10, %cst_6 [0] : vector<16x128xf32> to vector<128xf32>
    %12 = vector.shape_cast %11 : vector<128xf32> to vector<1x1x128xf32>
    %c0_7 = arith.constant 0 : index
    %c0_8 = arith.constant 0 : index
    %c0_9 = arith.constant 0 : index
    %13 = vector.load %arg3[%c0_7, %c0_8, %c0_9] : memref<1x1x128xf32, #tpu.memory_space<vmem>>, vector<1x1x128xf32>
    tpu.vector_store %arg3[%c0_7, %c0_8, %c0_9], %12 {strides = array<i32>} : memref<1x1x128xf32, #tpu.memory_space<vmem>>, vector<1x1x128xf32>,
    %14 = arith.mulf %10, %10 : vector<16x128xf32>
    %cst_10 = arith.constant dense<0.000000e+00> : vector<128xf32>
    %15 = vector.multi_reduction <add>, %14, %cst_10 [0] : vector<16x128xf32> to vector<128xf32>
    %16 = vector.shape_cast %15 : vector<128xf32> to vector<1x1x128xf32>
    %c0_11 = arith.constant 0 : index
    %c0_12 = arith.constant 0 : index
    %c0_13 = arith.constant 0 : index
    %17 = vector.load %arg4[%c0_11, %c0_12, %c0_13] : memref<1x1x128xf32, #tpu.memory_space<vmem>>, vector<1x1x128xf32>
    tpu.vector_store %arg4[%c0_11, %c0_12, %c0_13], %16 {strides = array<i32>} : memref<1x1x128xf32, #tpu.memory_space<vmem>>, vector<1x1x128xf32>,
    return
  }
  func.func @transform_0(%arg0: i32) -> (i32, i32, i32) {
    %c0_i32 = arith.constant 0 : i32
    %c0_i32_0 = arith.constant 0 : i32
    %c0_i32_1 = arith.constant 0 : i32
    return %arg0, %c0_i32, %c0_i32_0 : i32, i32, i32
  }
  func.func @transform_1(%arg0: i32) -> (i32, i32) {
    %c0_i32 = arith.constant 0 : i32
    %c0_i32_0 = arith.constant 0 : i32
    %c0_i32_1 = arith.constant 0 : i32
    return %c0_i32, %c0_i32_0 : i32, i32
  }
  func.func @transform_2(%arg0: i32) -> (i32, i32, i32) {
    %c0_i32 = arith.constant 0 : i32
    %c0_i32_0 = arith.constant 0 : i32
    %c0_i32_1 = arith.constant 0 : i32
    return %arg0, %c0_i32, %c0_i32_0 : i32, i32, i32
  }
  func.func @transform_3(%arg0: i32) -> (i32, i32, i32) {
    %c0_i32 = arith.constant 0 : i32
    %c0_i32_0 = arith.constant 0 : i32
    %c0_i32_1 = arith.constant 0 : i32
    return %arg0, %c0_i32, %c0_i32_0 : i32, i32, i32
  }
}

</mosaic_0001>

<llo_original>
// kernel: tpu_custom_call.1
$region0: #{tpu_custom_call.1}
  #allocation0 [shape = 'u32[]', space=smem, size = 0x4, offset = 0x4, fixed_abs, tag = 'smem constant byte address 0x4 - core index']
  #allocation1 [shape = 'u32[144,128]{1,0:T(1,128)}', space=vmem, size = 0x12000, scoped, tag = 'internal scratch']
  %s0 = inlined_call_operand.vmem [shape: f32[2,16,4], index: 0, kind: input, shape index: {}]
  %s1 = inlined_call_operand.vmem [shape: f32[12,128], index: 1, kind: input, shape index: {}]
  %s2 = inlined_call_operand.hbm [shape: f32[2,1,128], index: 2, kind: output, shape index: {0}]
  %s3 = inlined_call_operand.hbm [shape: f32[2,1,128], index: 3, kind: output, shape index: {1}]
  %4 = xla_tuple %s2, %s3
  %s5 = sld [smem:[#allocation0]]
  $region49: #{tpu_custom_call.1} parent=0
    _
  %s7 = ssub.s32 1, %s5
  %s8 = scalar_select 0, %s7, %s5
  $region1: #{tpu_custom_call.1} parent=0
    #allocation2 [shape = 'u8[1024]{0}', space=vmem, size = 0x400, scoped, tag = 'output window, operand 0']
    #allocation3 [shape = 's32[2]{0}', space=sflag, size = 0x8, scoped, tag = 'scoped memory for tpu_custom_call.1']
    #allocation4 [shape = 'u8[1024]{0}', space=vmem, size = 0x400, scoped, tag = 'output window, operand 1']
    #allocation5 [shape = 's32[2]{0}', space=sflag, size = 0x8, scoped, tag = 'scoped memory for tpu_custom_call.1']
    %9 = vsyncpa [#allocation3], 0
    %s10 = scalar_lea.sflag [#allocation3], 1
    %11 = vsyncpa %s10, 0
    %12 = vsyncpa [#allocation5], 0
    %s13 = scalar_lea.sflag [#allocation5], 1
    %14 = vsyncpa %s13, 0
    loop: start=0, step=1, limit=4
    $region2: #{tpu_custom_call.1} parent=1 // loop_pre_header
      _
    $region3: #{tpu_custom_call.1} parent=1 // loop_header
      %s16 = sphi 0, %s20
      %p17 = scmp.ge.s32.totalorder %s16, 4
      %s26 = sphi 0, %s28
      %s29 = sphi 0, %s26
      %s30 = sphi 0, %s29
      %s46 = sphi 0, %s30
      %s50 = sphi 0, %s50
      %s52 = sphi 0, %s50
      %s53 = sphi 0, %s52
      %s67 = sphi 0, %s53
      %s73 = sphi 0, %s75
      %s76 = sphi 0, %s73
      %s77 = sphi 0, %s76
      %s93 = sphi 0, %s77
      %s99 = sphi 0, %s101
      %s102 = sphi 0, %s99
      %s103 = sphi 0, %s102
      %s119 = sphi 0, %s103
    $region4: #{tpu_custom_call.1} parent=1 // loop_header_branch
      %19 = sbr.rel (%p17) target = $region8
    $region5: #{tpu_custom_call.1} parent=1 // loop_body
      %s21 = ssub.s32 %s16, 1
      %s22 = ssub.s32 %s16, 2
      %s23 = sadd.s32 %s16, 1
      %s24 = ssub.s32 %s16, %s23
      %p25 = scmp.eq.s32.totalorder %s24, 0
      %s27 = sadd.s32 %s26, 1
      %s28 = scalar_select %p25, %s26, %s27
      %p31 = pneg %p25
      %p32 = scmp.eq.s32.totalorder %s16, 1
      %p33 = por %p31, %p32
      %p34 = scmp.ne.s32.totalorder %s26, %s29
      %p35 = scmp.eq.s32.totalorder %s16, 0
      %p36 = por %p34, %p35
      %p37 = scmp.ne.s32.totalorder %s26, %s29
      %p38 = scmp.eq.s32.totalorder %s21, 1
      %p39 = por %p37, %p38
      %p40 = scmp.ne.s32.totalorder %s29, %s30
      %p41 = scmp.eq.s32.totalorder %s21, 0
      %p42 = por %p40, %p41
      %p43 = scmp.ne.s32.totalorder %s29, %s30
      %p44 = scmp.eq.s32.totalorder %s22, 1
      %p45 = por %p43, %p44
      %p47 = scmp.ne.s32.totalorder %s30, %s46
      %p48 = scmp.eq.s32.totalorder %s22, 0
      %p49 = por %p47, %p48
      %s51 = sadd.s32 %s50, 1
      %p54 = scmp.eq.s32.totalorder %s16, 1
      %p55 = scmp.ne.s32.totalorder %s50, %s52
      %p56 = scmp.eq.s32.totalorder %s16, 0
      %p57 = por %p55, %p56
      %p58 = scmp.ne.s32.totalorder %s50, %s52
      %p59 = scmp.eq.s32.totalorder %s21, 1
      %p60 = por %p58, %p59
      %p61 = scmp.ne.s32.totalorder %s52, %s53
      %p62 = scmp.eq.s32.totalorder %s21, 0
      %p63 = por %p61, %p62
      %p64 = scmp.ne.s32.totalorder %s52, %s53
      %p65 = scmp.eq.s32.totalorder %s22, 1
      %p66 = por %p64, %p65
      %p68 = scmp.ne.s32.totalorder %s53, %s67
      %p69 = scmp.eq.s32.totalorder %s22, 0
      %p70 = por %p68, %p69
      %s71 = ssub.s32 %s16, %s23
      %p72 = scmp.eq.s32.totalorder %s71, 0
      %s74 = sadd.s32 %s73, 1
      %s75 = scalar_select %p72, %s73, %s74
      %p78 = pneg %p72
      %p79 = scmp.eq.s32.totalorder %s16, 1
      %p80 = por %p78, %p79
      %p81 = scmp.ne.s32.totalorder %s73, %s76
      %p82 = scmp.eq.s32.totalorder %s16, 0
      %p83 = por %p81, %p82
      %p84 = scmp.ne.s32.totalorder %s73, %s76
      %p85 = scmp.eq.s32.totalorder %s21, 1
      %p86 = por %p84, %p85
      %p87 = scmp.ne.s32.totalorder %s76, %s77
      %p88 = scmp.eq.s32.totalorder %s21, 0
      %p89 = por %p87, %p88
      %p90 = scmp.ne.s32.totalorder %s76, %s77
      %p91 = scmp.eq.s32.totalorder %s22, 1
      %p92 = por %p90, %p91
      %p94 = scmp.ne.s32.totalorder %s77, %s93
      %p95 = scmp.eq.s32.totalorder %s22, 0
      %p96 = por %p94, %p95
      %s97 = ssub.s32 %s16, %s23
      %p98 = scmp.eq.s32.totalorder %s97, 0
      %s100 = sadd.s32 %s99, 1
      %s101 = scalar_select %p98, %s99, %s100
      %p104 = pneg %p98
      %p105 = scmp.eq.s32.totalorder %s16, 1
      %p106 = por %p104, %p105
      %p107 = scmp.ne.s32.totalorder %s99, %s102
      %p108 = scmp.eq.s32.totalorder %s16, 0
      %p109 = por %p107, %p108
      %p110 = scmp.ne.s32.totalorder %s99, %s102
      %p111 = scmp.eq.s32.totalorder %s21, 1
      %p112 = por %p110, %p111
      %p113 = scmp.ne.s32.totalorder %s102, %s103
      %p114 = scmp.eq.s32.totalorder %s21, 0
      %p115 = por %p113, %p114
      %p116 = scmp.ne.s32.totalorder %s102, %s103
      %p117 = scmp.eq.s32.totalorder %s22, 1
      %p118 = por %p116, %p117
      %p120 = scmp.ne.s32.totalorder %s103, %s119
      %p121 = scmp.eq.s32.totalorder %s22, 0
      %p122 = por %p120, %p121
      %p123 = scmp.le.s32.totalorder 1, %s16
      %p124 = scmp.lt.s32.totalorder %s16, 3
      %p125 = pnand %p123, %p124
      %p126 = pneg %p125
      // Predicated region
      $region9: #{tpu_custom_call.1} parent=5 // pred_check
        _
      $region10: #{tpu_custom_call.1} parent=5 // pred_check_branch
        %128 = sbr.rel (%p125) target = $region12
      $region11: #{tpu_custom_call.1} parent=5 // pred_region
        %s129 = ssub.s32 %s16, 1
        // Predicated region
        $region13: #{tpu_custom_call.1} parent=11 // pred_check
          %p130 = pneg %p63
        $region14: #{tpu_custom_call.1} parent=11 // pred_check_branch
          %132 = sbr.rel (%p130) target = $region16
        $region15: #{tpu_custom_call.1} parent=11 // pred_region
          _
        $region16: #{tpu_custom_call.1} parent=11 // pred_fallthru
          _
      $region12: #{tpu_custom_call.1} parent=5 // pred_fallthru
        _
      %p133 = scmp.lt.s32.totalorder %s16, 2
      // Predicated region
      $region17: #{tpu_custom_call.1} parent=5 // pred_check
        %p134 = pneg %p133
      $region18: #{tpu_custom_call.1} parent=5 // pred_check_branch
        %136 = sbr.rel (%p134) target = $region20
      $region19: #{tpu_custom_call.1} parent=5 // pred_region
        // Predicated region
        $region21: #{tpu_custom_call.1} parent=19 // pred_check
          %p137 = pneg %p36
        $region22: #{tpu_custom_call.1} parent=19 // pred_check_branch
          %139 = sbr.rel (%p137) target = $region24
        $region23: #{tpu_custom_call.1} parent=19 // pred_region
          %p140 = scmp.lt.s32.totalorder %s16, 1
          %s141 = scalar_select %p140, %s16, 1
          %s142 = smul.addr %s141, 2
          %s143 = smul.addr %s142, 8
          %s144 = scalar_lea.vmem %s0, %s143
        $region24: #{tpu_custom_call.1} parent=19 // pred_fallthru
          _
      $region20: #{tpu_custom_call.1} parent=5 // pred_fallthru
        _
      %p145 = scmp.le.s32.totalorder 1, %s16
      %p146 = scmp.lt.s32.totalorder %s16, 3
      %p147 = pnand %p145, %p146
      %p148 = pneg %p147
      // Predicated region
      $region25: #{tpu_custom_call.1} parent=5 // pred_check
        _
      $region26: #{tpu_custom_call.1} parent=5 // pred_check_branch
        %150 = sbr.rel (%p147) target = $region28
      $region27: #{tpu_custom_call.1} parent=5 // pred_region
        %s151 = ssub.s32 %s16, 1
        %p152 = scmp.lt.s32.totalorder %s21, 1
        %s153 = scalar_select %p152, %s21, 1
        %s154 = smul.addr %s153, 2
        %s155 = smul.addr %s154, 8
        %s156 = scalar_lea.vmem %s0, %s155
        %p157 = pneg %p42
        %p158 = pneg %p39
        %p159 = pneg %p63
        %p160 = pneg %p60
        %p161 = pneg %p89
        %p162 = pneg %p86
        %s163 = sand.u32 %s76, 1
        %s164 = scalar_lea.sflag [#allocation3], %s163
        %s165 = sand.u32 %s76, 1
        %s166 = scalar_lea.vmem [#allocation2], %s165
        %p167 = pneg %p115
        %p168 = pneg %p112
        %s169 = sand.u32 %s102, 1
        %s170 = scalar_lea.sflag [#allocation5], %s169
        %s171 = sand.u32 %s102, 1
        %s172 = scalar_lea.vmem [#allocation4], %s171
        %p173 = scmp.lt.s32.totalorder %s21, 1
        %s174 = scalar_select %p173, %s21, 1
        %s175 = smul.addr %s174, 2
        %s176 = smul.addr %s175, 8
        %s177 = scalar_lea.vmem %s0, %s176
        %v178 = vld [vmem:[%s177] sm:$0xff]
        %v179 = vld [vmem:[%s177 + $0x8] sm:$0xff]
        %vm182 = vcmask 1040384
        %v183 = vrot.slane %v178, 7
        %v184 = vrot.slane %v179, 7
        %v185 = vsel %vm182, %v183, %v184
        %v188 = vsel %vm182, 0.0, %v183
        %vm189 = vcmask 1046528
        %v190 = vrot.slane %v178, 1
        %v191 = vrot.slane %v179, 1
        %v192 = vsel %vm189, %v190, %v191
        %v194 = vsel %vm189, %v191, 0.0
        %195 = vrot.lane.b32.xlu0 %v178, 4
        %v196 = vpop.permute.xlu0 %195
        %197 = vrot.lane.b32.xlu0 %v179, 4
        %v198 = vpop.permute.xlu0 %197
        %202 = vrot.lane.b32.xlu0 %v192, 8
        %v203 = vpop.permute.xlu0 %202
        %204 = vrot.lane.b32.xlu0 %v194, 8
        %v205 = vpop.permute.xlu0 %204
        %vm208 = vcmask 31744
        %v209 = vsel %vm208, %v188, %v196
        %v210 = vsel %vm208, %v185, %v198
        %vm211 = vcmask 64512
        %v212 = vsel %vm211, %v209, %v203
        %v213 = vsel %vm211, %v210, %v205
        %v214 = vld [vmem:[%s1] sm:$0xff]
        %v215 = vld [vmem:[%s1 + $0x8] sm:$0xf]
        %vm216 = vcmask 97280
        %v218 = vsel %vm216, %v212, 0
        %v221 = vsel %vm216, %v213, 0
        %vm223 = vcmask 1043456
        %v225 = vsel %vm223, %v215, 0
        %227 = vmatprep.subr.mxu0 0.0
        %228 = vmatpush1.msra.mxu0 0.0
        %229 = vmatprep.subr.mxu0 0.0
        %230 = vmatpush1.msra.mxu0 0.0
        %231 = vmatprep.subr.mxu0 0.0
        %232 = vmatpush1.msra.mxu0 0.0
        %233 = vmatprep.subr.mxu0 0.0
        %234 = vmatpush1.msra.mxu0 0.0
        %235 = vmatprep.subr.mxu0 0.0
        %236 = vmatpush1.msra.mxu0 0.0
        %237 = vmatprep.subr.mxu0 0.0
        %238 = vmatpush1.msra.mxu0 0.0
        %239 = vmatprep.subr.mxu0 0.0
        %240 = vmatpush1.msra.mxu0 0.0
        %241 = vmatprep.subr.mxu0 0.0
        %242 = vmatpush1.msra.mxu0 0.0
        %243 = vmatprep.subr.mxu0 0.0
        %244 = vmatpush1.msra.mxu0 0.0
        %245 = vmatprep.subr.mxu0 0.0
        %246 = vmatpush1.msra.mxu0 0.0
        %247 = vmatprep.subr.mxu0 0.0
        %248 = vmatpush1.msra.mxu0 0.0
        %249 = vmatprep.subr.mxu0 0.0
        %250 = vmatpush1.msra.mxu0 0.0
        %251 = vmatprep.subr.mxu0 0.0
        %252 = vmatpush1.msra.mxu0 0.0
        %253 = vmatprep.subr.mxu0 0.0
        %254 = vmatpush1.msra.mxu0 0.0
        %255 = vmatprep.subr.mxu0 0.0
        %256 = vmatpush1.msra.mxu0 %v225
        %257 = vmatprep.subr.mxu0 0.0
        %258 = vmatpush1.msra.mxu0 %v214
        %259 = vmatprep.subr.mxu0 0.0
        %260 = vmatpush2.msra.mxu0 0.0
        %261 = vmatprep.subr.mxu0 0.0
        %262 = vmatpush2.msra.mxu0 0.0
        %263 = vmatprep.subr.mxu0 0.0
        %264 = vmatpush2.msra.mxu0 0.0
        %265 = vmatprep.subr.mxu0 0.0
        %266 = vmatpush2.msra.mxu0 0.0
        %267 = vmatprep.subr.mxu0 0.0
        %268 = vmatpush2.msra.mxu0 0.0
        %269 = vmatprep.subr.mxu0 0.0
        %270 = vmatpush2.msra.mxu0 0.0
        %271 = vmatprep.subr.mxu0 0.0
        %272 = vmatpush2.msra.mxu0 0.0
        %273 = vmatprep.subr.mxu0 0.0
        %274 = vmatpush2.msra.mxu0 0.0
        %275 = vmatprep.subr.mxu0 0.0
        %276 = vmatpush2.msra.mxu0 0.0
        %277 = vmatprep.subr.mxu0 0.0
        %278 = vmatpush2.msra.mxu0 0.0
        %279 = vmatprep.subr.mxu0 0.0
        %280 = vmatpush2.msra.mxu0 0.0
        %281 = vmatprep.subr.mxu0 0.0
        %282 = vmatpush2.msra.mxu0 0.0
        %283 = vmatprep.subr.mxu0 0.0
        %284 = vmatpush2.msra.mxu0 0.0
        %285 = vmatprep.subr.mxu0 0.0
        %286 = vmatpush2.msra.mxu0 0.0
        %287 = vmatprep.subr.mxu0 0.0
        %288 = vmatpush2.msra.mxu0 0.0
        %289 = vmatprep.subr.mxu0 0.0
        %290 = vmatpush2.msra.mxu0 0.0
        %291 = vmatprep.mubr.f32.mxu0 0.0
        %292 = vmatmul.mubr.f32.gmra.mxu0 %v218
        %v293 = vpop.f32.mrf.mxu0
        %v294 = vadd.f32 0.0, %v293
        %v295 = vpop.f32.mrf.mxu0
        %296 = vmatprep.mubr.f32.mxu0 0.0
        %297 = vmatmul.mubr.f32.gmra.mxu0 %v221
        %v298 = vpop.f32.mrf.mxu0
        %v299 = vadd.f32 0.0, %v298
        %v300 = vpop.f32.mrf.mxu0
        %301 = vdwg.mxu0
        %v302 = vadd.f32 %v294, %v299
        %v303 = vrot.slane %v302, 4
        %v304 = vadd.f32 %v302, %v303
        %v305 = vrot.slane %v304, 2
        %v306 = vadd.f32 %v304, %v305
        %v307 = vrot.slane %v306, 1
        %v308 = vadd.f32 %v306, %v307
        %309 = vst [vmem:[%s166] sm:$0x1] %v308
        %v310 = vmul.f32 %v294, %v294
        %v311 = vmul.f32 %v299, %v299
        %v312 = vadd.f32 %v310, %v311
        %v313 = vrot.slane %v312, 4
        %v314 = vadd.f32 %v312, %v313
        %v315 = vrot.slane %v314, 2
        %v316 = vadd.f32 %v314, %v315
        %v317 = vrot.slane %v316, 1
        %v318 = vadd.f32 %v316, %v317
        %319 = vst [vmem:[%s172] sm:$0x1] %v318
        %s320 = sand.u32 %s76, 1
        %s321 = scalar_lea.sflag [#allocation3], %s320
        %s322 = sand.u32 %s76, 1
        %s323 = scalar_lea.vmem [#allocation2], %s322
        %s324 = sand.u32 %s102, 1
        %s325 = scalar_lea.sflag [#allocation5], %s324
        %s326 = sand.u32 %s102, 1
        %s327 = scalar_lea.vmem [#allocation4], %s326
        // Predicated region
        $region29: #{tpu_custom_call.1} parent=27 // pred_check
          %p328 = pneg %p86
        $region30: #{tpu_custom_call.1} parent=27 // pred_check_branch
          %330 = sbr.rel (%p328) target = $region32
        $region31: #{tpu_custom_call.1} parent=27 // pred_region
          %s332 = ssub.s32 16, 16
          %333 = vsyncadd %s321, %s332
          %s334 = smul.addr %s21, 16
          %s335 = scalar_lea.hbm %s2, %s334
          %s337 = sshll.u32 %s323, 4
          %s338 = int_to_ptr.vmem [resolvable:$true] %s337
          %340 = dma.vmem_to_hbm [thread:$0]  %s338, 16, %s335, %s321
        $region32: #{tpu_custom_call.1} parent=27 // pred_fallthru
          _
        // Predicated region
        $region33: #{tpu_custom_call.1} parent=27 // pred_check
          %p341 = pneg %p112
        $region34: #{tpu_custom_call.1} parent=27 // pred_check_branch
          %343 = sbr.rel (%p341) target = $region36
        $region35: #{tpu_custom_call.1} parent=27 // pred_region
          %s345 = ssub.s32 16, 16
          %346 = vsyncadd %s325, %s345
          %s347 = smul.addr %s21, 16
          %s348 = scalar_lea.hbm %s3, %s347
          %s350 = sshll.u32 %s327, 4
          %s351 = int_to_ptr.vmem [resolvable:$true] %s350
          %353 = dma.vmem_to_hbm [thread:$0]  %s351, 16, %s348, %s325
        $region36: #{tpu_custom_call.1} parent=27 // pred_fallthru
          _
      $region28: #{tpu_custom_call.1} parent=5 // pred_fallthru
        _
      %p354 = scmp.le.s32.totalorder 2, %s16
      // Predicated region
      $region37: #{tpu_custom_call.1} parent=5 // pred_check
        %p355 = pneg %p354
      $region38: #{tpu_custom_call.1} parent=5 // pred_check_branch
        %357 = sbr.rel (%p355) target = $region40
      $region39: #{tpu_custom_call.1} parent=5 // pred_region
        %s358 = ssub.s32 %s16, 2
        // Predicated region
        $region41: #{tpu_custom_call.1} parent=39 // pred_check
          %p359 = pneg %p92
        $region42: #{tpu_custom_call.1} parent=39 // pred_check_branch
          %361 = sbr.rel (%p359) target = $region44
        $region43: #{tpu_custom_call.1} parent=39 // pred_region
          %s362 = sand.u32 %s77, 1
          %s363 = scalar_lea.sflag [#allocation3], %s362
          %s364 = sand.u32 %s77, 1
          %s365 = scalar_lea.vmem [#allocation2], %s364
          %366 = dma.done %s363, 16
        $region44: #{tpu_custom_call.1} parent=39 // pred_fallthru
          _
        // Predicated region
        $region45: #{tpu_custom_call.1} parent=39 // pred_check
          %p367 = pneg %p118
        $region46: #{tpu_custom_call.1} parent=39 // pred_check_branch
          %369 = sbr.rel (%p367) target = $region48
        $region47: #{tpu_custom_call.1} parent=39 // pred_region
          %s370 = sand.u32 %s103, 1
          %s371 = scalar_lea.sflag [#allocation5], %s370
          %s372 = sand.u32 %s103, 1
          %s373 = scalar_lea.vmem [#allocation4], %s372
          %374 = dma.done %s371, 16
        $region48: #{tpu_custom_call.1} parent=39 // pred_fallthru
          _
      $region40: #{tpu_custom_call.1} parent=5 // pred_fallthru
        _
    $region6: #{tpu_custom_call.1} parent=1 // loop_footer
      %s20 = sadd.s32 1, %s16
    $region7: #{tpu_custom_call.1} parent=1 // loop_footer_branch
      %15 = sbr.rel target = $region3
    $region8: #{tpu_custom_call.1} parent=1 // loop_exit
      _
    %375 = vsyncpa [#allocation3], 1
    %s376 = scalar_lea.sflag [#allocation3], 1
    %377 = vsyncpa %s376, 1
    %378 = vsyncpa [#allocation5], 1
    %s379 = scalar_lea.sflag [#allocation5], 1
    %380 = vsyncpa %s379, 1

</llo_original>
